<compile_context>
chip_gen: v5e
topology: v5e:2x2
jax: 0.10.0
libtpu: 0.0.40
codegen_flags: <defaults>
</compile_context>

<pallas_src>
import jax
import jax.numpy as jnp
from jax.experimental import pallas as pl
from jax.experimental.pallas import tpu as pltpu


def _edge_mapping_kernel(x_ref, w_ref, o_ref):
    # x_ref: (TE, D) f32, w_ref: (1, C*D) f32, o_ref: (TE, C*D) f32
    x = x_ref[...]                                              # (TE, D)
    d = x_ref.shape[-1]
    c = o_ref.shape[-1] // d
    norm = jnp.sqrt(jnp.sum(x * x, axis=1, keepdims=True))      # (TE, 1)
    inv = pl.reciprocal(norm + 1e-7, approx=True)               # EUP (free slot)
    xn = x * inv                                                # (TE, D)
    xt = jnp.tile(xn, (1, c))                                   # (TE, C*D) lane-dense
    o_ref[...] = xt * w_ref[...]                                # broadcast (1, C*D)


def _choose_block_e(E, C, D, target_out_bytes=4 << 20):
    """Edge tile sized so double-buffered in+out blocks stay far below VMEM
    on every generation (v7x has only 64 MiB physical / 32 MiB default scoped)."""
    rows = max(8, target_out_bytes // max(1, C * D * 4))
    rows = max(8, (rows // 8) * 8)        # sublane-aligned when actually tiling
    if rows >= E:
        return E                          # full extent: any E is a legal block dim
    return rows


def edge_mapping(edge_vector, weight):
    """edge_vector: (E, D) f32, weight: (C, 1) f32 -> (E, C, D) f32."""
    E, D = edge_vector.shape
    C = weight.shape[0]

    # Lane-dense weight row: w_row[0, c*D + d] = weight[c, 0]  (built once, host side)
    w_row = jnp.broadcast_to(weight.reshape(C, 1), (C, D)).reshape(1, C * D)
    w_row = w_row.astype(edge_vector.dtype)

    te = _choose_block_e(E, C, D)
    grid = (pl.cdiv(E, te),)

    out_flat = pl.pallas_call(
        _edge_mapping_kernel,
        out_shape=jax.ShapeDtypeStruct((E, C * D), edge_vector.dtype),
        grid=grid,
        in_specs=[
            pl.BlockSpec((te, D), lambda i: (i, 0)),
            pl.BlockSpec((1, C * D), lambda i: (0, 0)),   # constant index -> not re-streamed
        ],
        out_specs=pl.BlockSpec((te, C * D), lambda i: (i, 0)),
        compiler_params=pltpu.CompilerParams(
            dimension_semantics=("parallel",),            # megacore split on v7x
            vmem_limit_bytes=32 * 1024 * 1024,            # safe on v5e/v6e/v7x
        ),
    )(edge_vector, w_row)

    # Free: (E, C*D) and (E, C, D) share the same row-major layout.
    return out_flat.reshape(E, C, D)


def edge_mapping_ref(edge_vector, weight):
    norm = jnp.linalg.norm(edge_vector, axis=1, keepdims=True)
    xn = edge_vector / (norm + 1e-7)
    # Linear(1, C, bias=False) over unsqueezed last dim then transpose(1, -1)
    expansion = xn[:, :, None] * weight[:, 0][None, None, :]   # (E, D, C)
    return jnp.transpose(expansion, (0, 2, 1))                 # (E, C, D)


if __name__ == "__main__":
    key = jax.random.PRNGKey(0)
    k_x, k_w = jax.random.split(key)

    E, D, C = 8, 16, 4          # edges, vector dim, edge_channels
    edge_vector = jax.random.normal(k_x, (E, D), dtype=jnp.float32)
    # Deterministic init of nn.Linear(1, C, bias=False) weight: shape (C, 1)
    weight = jax.random.uniform(k_w, (C, 1), dtype=jnp.float32, minval=-1.0, maxval=1.0)

    out = edge_mapping(edge_vector, weight)
    out = jax.block_until_ready(out)

    ref = edge_mapping_ref(edge_vector, weight)
    assert out.shape == (E, C, D)
    # approx reciprocal (EUP) vs exact divide in the reference -> slightly looser tol.
    assert jnp.allclose(out, ref, atol=1e-3, rtol=1e-3), float(jnp.max(jnp.abs(out - ref)))

    print("KERNEL_OK")
</pallas_src>

<mosaic_0001>
module attributes {stable_mosaic.version = 11 : i64} {
  func.func @_edge_mapping_kernel(%arg0: i32, %arg1: memref<8x16xf32, #tpu.memory_space<vmem>>, %arg2: memref<1x64xf32, #tpu.memory_space<vmem>>, %arg3: memref<8x64xf32, #tpu.memory_space<vmem>>) attributes {dimension_semantics = [#tpu.dimension_semantics<parallel>], iteration_bounds = array<i64: 1>, scalar_prefetch = 0 : i64, scratch_operands = 0 : i64, tpu.core_type = #tpu.core_type<tc>, window_params = [{transform_indices = @transform_0, window_bounds = array<i64: 8, 16>}, {pipeline_mode = #tpu.pipeline_mode<synchronous>, transform_indices = @transform_1, window_bounds = array<i64: 1, 64>}, {transform_indices = @transform_2, window_bounds = array<i64: 8, 64>}]} {
    %c0 = arith.constant 0 : index
    %c0_0 = arith.constant 0 : index
    %0 = vector.load %arg1[%c0, %c0_0] : memref<8x16xf32, #tpu.memory_space<vmem>>, vector<8x16xf32>
    %1 = arith.mulf %0, %0 : vector<8x16xf32>
    %cst = arith.constant dense<0.000000e+00> : vector<8xf32>
    %2 = vector.multi_reduction <add>, %1, %cst [1] : vector<8x16xf32> to vector<8xf32>
    %3 = vector.shape_cast %2 : vector<8xf32> to vector<8x1xf32>
    %4 = math.sqrt %3 : vector<8x1xf32>
    %cst_1 = arith.constant 1.000000e-07 : f32
    %5 = vector.broadcast %cst_1 : f32 to vector<8x1xf32>
    %6 = arith.addf %4, %5 : vector<8x1xf32>
    %7 = tpu.reciprocal %6 {approx = true} : vector<8x1xf32> -> vector<8x1xf32>
    %8 = vector.broadcast %7 : vector<8x1xf32> to vector<8x16xf32>
    %9 = arith.mulf %0, %8 : vector<8x16xf32>
    %10 = tpu.concatenate %9, %9, %9, %9 in 1 : vector<8x16xf32>, vector<8x16xf32>, vector<8x16xf32>, vector<8x16xf32> -> vector<8x64xf32>
    %c0_2 = arith.constant 0 : index
    %c0_3 = arith.constant 0 : index
    %11 = vector.load %arg2[%c0_2, %c0_3] : memref<1x64xf32, #tpu.memory_space<vmem>>, vector<1x64xf32>
    %12 = vector.broadcast %11 : vector<1x64xf32> to vector<8x64xf32>
    %13 = arith.mulf %10, %12 : vector<8x64xf32>
    %c0_4 = arith.constant 0 : index
    %c0_5 = arith.constant 0 : index
    %14 = vector.load %arg3[%c0_4, %c0_5] : memref<8x64xf32, #tpu.memory_space<vmem>>, vector<8x64xf32>
    tpu.vector_store %arg3[%c0_4, %c0_5], %13 {strides = array<i32>} : memref<8x64xf32, #tpu.memory_space<vmem>>, vector<8x64xf32>,
    return
  }
  func.func @transform_0(%arg0: i32) -> (i32, i32) {
    %c0_i32 = arith.constant 0 : i32
    %c0_i32_0 = arith.constant 0 : i32
    return %arg0, %c0_i32 : i32, i32
  }
  func.func @transform_1(%arg0: i32) -> (i32, i32) {
    %c0_i32 = arith.constant 0 : i32
    %c0_i32_0 = arith.constant 0 : i32
    %c0_i32_1 = arith.constant 0 : i32
    return %c0_i32, %c0_i32_0 : i32, i32
  }
  func.func @transform_2(%arg0: i32) -> (i32, i32) {
    %c0_i32 = arith.constant 0 : i32
    %c0_i32_0 = arith.constant 0 : i32
    return %arg0, %c0_i32 : i32, i32
  }
}

</mosaic_0001>

<llo_original>
// kernel: tpu_custom_call.1
$region0: #{tpu_custom_call.1}
  #allocation0 [shape = 'u32[]', space=smem, size = 0x4, offset = 0x4, fixed_abs, tag = 'smem constant byte address 0x4 - core index']
  #allocation1 [shape = 'u32[72,128]{1,0:T(1,128)}', space=vmem, size = 0x9000, scoped, tag = 'internal scratch']
  %s0 = inlined_call_operand.hbm [shape: f32[8,16], index: 0, kind: input, shape index: {}]
  %s1 = inlined_call_operand.hbm [shape: f32[1,64], index: 1, kind: input, shape index: {}]
  %s2 = inlined_call_operand.hbm [shape: f32[8,64], index: 2, kind: output, shape index: {}]
  %s3 = sld [smem:[#allocation0]]
  $region26: #{tpu_custom_call.1} parent=0
    _
  %s5 = ssub.s32 1, %s3
  %s6 = scalar_select 0, %s5, %s3
  $region1: #{tpu_custom_call.1} parent=0
    #allocation2 [shape = 'u8[4096]{0}', space=vmem, size = 0x1000, scoped, tag = 'input window, operand 0, single buffered']
    #allocation3 [shape = 's32[1]{0}', space=sflag, size = 0x4, scoped, tag = 'scoped memory for tpu_custom_call.1']
    #allocation4 [shape = 's32[1]{0}', space=sflag, size = 0x4, scoped, tag = 'scoped memory for tpu_custom_call.1']
    #allocation5 [shape = 'u8[512]{0}', space=vmem, size = 0x400, scoped, tag = 'input window, operand 1, single buffered']
    #allocation6 [shape = 's32[1]{0}', space=sflag, size = 0x4, scoped, tag = 'scoped memory for tpu_custom_call.1']
    #allocation7 [shape = 'u8[4096]{0}', space=vmem, size = 0x1000, scoped, tag = 'output window, operand 0, single buffered']
    %7 = vsyncpa [#allocation3], 0
    %8 = vsyncpa [#allocation6], 0
    %9 = vsyncpa [#allocation4], 0
    // Predicated region
    $region2: #{tpu_custom_call.1} parent=1 // pred_check
      _
    $region3: #{tpu_custom_call.1} parent=1 // pred_check_branch
      %11 = sbr.rel (0) target = $region5
    $region4: #{tpu_custom_call.1} parent=1 // pred_region
      %13 = vsyncadd [#allocation3], 0
      %s15 = sshll.u32 %s0, 4
      %s16 = int_to_ptr.hbm [resolvable:$true] %s15
      %s17 = sshll.u32 [#allocation2], 4
      %s18 = int_to_ptr.vmem [resolvable:$true] %s17
      %20 = dma.hbm_to_vmem [thread:$0]  %s16, 128, %s18, [#allocation3]
    $region5: #{tpu_custom_call.1} parent=1 // pred_fallthru
      _
    // Predicated region
    $region6: #{tpu_custom_call.1} parent=1 // pred_check
      _
    $region7: #{tpu_custom_call.1} parent=1 // pred_check_branch
      %22 = sbr.rel (0) target = $region9
    $region8: #{tpu_custom_call.1} parent=1 // pred_region
      %24 = vsyncadd [#allocation6], 0
      %s26 = sshll.u32 %s1, 4
      %s27 = int_to_ptr.hbm [resolvable:$true] %s26
      %s28 = sshll.u32 [#allocation5], 4
      %s29 = int_to_ptr.vmem [resolvable:$true] %s28
      %31 = dma.hbm_to_vmem [thread:$0]  %s27, 16, %s29, [#allocation6]
    $region9: #{tpu_custom_call.1} parent=1 // pred_fallthru
      _
    // Predicated region
    $region10: #{tpu_custom_call.1} parent=1 // pred_check
      _
    $region11: #{tpu_custom_call.1} parent=1 // pred_check_branch
      %33 = sbr.rel (0) target = $region13
    $region12: #{tpu_custom_call.1} parent=1 // pred_region
      %35 = dma.done [#allocation3], 128
    $region13: #{tpu_custom_call.1} parent=1 // pred_fallthru
      _
    // Predicated region
    $region14: #{tpu_custom_call.1} parent=1 // pred_check
      _
    $region15: #{tpu_custom_call.1} parent=1 // pred_check_branch
      %37 = sbr.rel (0) target = $region17
    $region16: #{tpu_custom_call.1} parent=1 // pred_region
      %39 = dma.done [#allocation6], 16
    $region17: #{tpu_custom_call.1} parent=1 // pred_fallthru
      _
    %v40 = vld [vmem:[#allocation2] sm:$0xff]
    %v41 = vmul.f32 %v40, %v40
    %vm42 = vcmask 130048
    %v43 = vsel %vm42, %v41, 0.0
    %44 = vadd.xlane.f32.xlu0 %v43
    %v45 = vpop.xlane.xlu0 %44
    %v46 = vrsqrt.pop %v45
    %v47 = vmul.f32 %v46, %v45
    %v48 = vmul.f32 %v47, %v46
    %v49 = vmul.f32 0.5, %v48
    %v50 = vsub.f32 1.5, %v49
    %v51 = vmul.f32 %v46, %v50
    %v52 = vmul.f32 %v45, %v51
    %vm53 = vcmp.eq.f32.partialorder %v45, inf
    %v54 = vsel %vm53, %v45, %v52
    %vm55 = vcmp.eq.f32.partialorder %v45, 0.0
    %v56 = vand.u32 %v45, 2147483648
    %v57 = vsel %vm55, %v56, %v54
    %v58 = vadd.f32 %v57, 1e-07
    %v59 = vrcp.pop %v58
    %v60 = vmul.f32 %v40, %v59
    %62 = vrot.lane.b32.xlu0 %v60, 16
    %v63 = vpop.permute.xlu0 %62
    %65 = vrot.lane.b32.xlu0 %v60, 32
    %v66 = vpop.permute.xlu0 %65
    %68 = vrot.lane.b32.xlu0 %v60, 48
    %v69 = vpop.permute.xlu0 %68
    %v71 = vsel %vm42, %v60, %v63
    %vm72 = vcmask 261120
    %v73 = vsel %vm72, %v71, %v66
    %vm74 = vcmask 392192
    %v75 = vsel %vm74, %v73, %v69
    %v76 = vld [vmem:[#allocation5] sm:$0x1]
    %v78 = vperm.slane %v76, 0
    %v80 = vmul.f32 %v75, %v78
    %vm81 = vcmask 523264
    %82 = vst.msk [vmem:[#allocation7] sm:$0xff] %vm81, %v80
    // Predicated region
    $region18: #{tpu_custom_call.1} parent=1 // pred_check
      _
    $region19: #{tpu_custom_call.1} parent=1 // pred_check_branch
      %84 = sbr.rel (0) target = $region21
    $region20: #{tpu_custom_call.1} parent=1 // pred_region
      %86 = vsyncadd [#allocation4], 0
      %s88 = sshll.u32 [#allocation7], 4
      %s89 = int_to_ptr.vmem [resolvable:$true] %s88
      %s90 = sshll.u32 %s2, 4
      %s91 = int_to_ptr.hbm [resolvable:$true] %s90
      %93 = dma.vmem_to_hbm [thread:$0]  %s89, 128, %s91, [#allocation4]
    $region21: #{tpu_custom_call.1} parent=1 // pred_fallthru
      _
    // Predicated region
    $region22: #{tpu_custom_call.1} parent=1 // pred_check
      _
    $region23: #{tpu_custom_call.1} parent=1 // pred_check_branch
      %95 = sbr.rel (0) target = $region25
    $region24: #{tpu_custom_call.1} parent=1 // pred_region
      %97 = dma.done [#allocation4], 128
    $region25: #{tpu_custom_call.1} parent=1 // pred_fallthru
      _
    %98 = vsyncpa [#allocation3], 1
    %99 = vsyncpa [#allocation6], 1
    %100 = vsyncpa [#allocation4], 1

</llo_original>
